<compile_context>
chip_gen: v7x
topology: tpu7x:2x2x1
jax: 0.10.0
libtpu: 0.0.40
codegen_flags: <defaults>
</compile_context>

<pallas_src>
import functools

import jax
import jax.numpy as jnp
from jax import lax
from jax.experimental import pallas as pl
from jax.experimental.pallas import tpu as pltpu


def _teacher_kernel(x_ref,      # (T, B, Din)  f32, time-major, B % 8 == 0
                    w_ref,      # (Din + 2H, 8H) bf16: rows [Wx ; Wr]
                    misc_ref,   # (3, 8H) f32: [fused bias ; fcw (padded) ; fcb (padded)]
                    out_ref,    # (B, 1) f32
                    *, hidden_size, seq_len, batch, input_size):
    H, T, B, Din = hidden_size, seq_len, batch, input_size
    G2 = 8 * H
    f32, bf16 = jnp.float32, jnp.bfloat16

    # pre-packed, pre-cast weights (no per-call casts; 3 input DMAs total)
    wx = w_ref[0:Din, :]                    # (Din, 8H) bf16  layer-0 input proj
    wr = w_ref[Din:Din + 2 * H, :]          # (2H, 8H)  bf16  fused recurrent weight
    bfused = misc_ref[0:1, :]               # (1, 8H)   f32   [b0 | b1] interleaved
    fcw = misc_ref[1:2, 0:H]                # (1, H)    f32
    fcb = misc_ref[2:3, 0:1]                # (1, 1)    f32

    # ---- hoisted layer-0 input projection (+ both biases), fused gate layout.
    # x is time-major and B % 8 == 0, so (T, B) -> T*B rows is a vreg relabel
    # and rows [t*B:(t+1)*B] are sublane aligned.
    x_flat = x_ref[...].reshape(T * B, Din).astype(bf16)
    zx = jnp.dot(x_flat, wx, preferred_element_type=f32) + bfused   # (T*B, 8H)

    # hoisted lane masks / activation constants (fused order [i0,i1,f0,f1,g0,g1,o0,o1])
    lane = lax.broadcasted_iota(jnp.int32, (B, G2), 1)
    is_g = (lane >= 4 * H) & (lane < 6 * H)          # g-gate lanes, both layers
    act_scale = jnp.where(is_g, 1.0, 0.5)            # pre/post scale for tanh identity
    act_shift = jnp.where(is_g, 0.0, 0.5)
    keep_l0 = lax.broadcasted_iota(jnp.int32, (B, 2 * H), 1) < H   # layer-0 lane half

    hcat = jnp.zeros((B, 2 * H), bf16)    # [h1 | h2]  (fused matmul LHS)
    ccat = jnp.zeros((B, 2 * H), f32)     # [c1 | c2]
    h_f32 = jnp.zeros((B, 2 * H), f32)

    # Skewed, fully unrolled recurrence: iteration t computes layer-0 step t and
    # layer-1 step t-1 from ONE fused MXU dot.  t = 0 is a dot-free prologue
    # (h1[-1] = 0), t = T the layer-1-only epilogue.
    for t in range(T + 1):
        if t == 0:
            z = zx[0:B, :]
        else:
            zr = jnp.dot(hcat, wr, preferred_element_type=f32)       # (B, 8H)
            z = zr + (zx[t * B:(t + 1) * B, :] if t < T else bfused)
        # one EUP pass over all 8 gate blocks: sigmoid(x) = 0.5*tanh(x/2) + 0.5,
        # g-gate lanes get a plain tanh (selected via hoisted scale/shift).
        a = jnp.tanh(z * act_scale) * act_scale + act_shift
        i_cat = a[:, 0:2 * H]          # [i0 | i1]
        f_cat = a[:, 2 * H:4 * H]      # [f0 | f1]
        g_cat = a[:, 4 * H:6 * H]      # [g0 | g1]
        o_cat = a[:, 6 * H:8 * H]      # [o0 | o1]
        ccat = f_cat * ccat + i_cat * g_cat          # both layers, one VPU pass
        h_f32 = o_cat * jnp.tanh(ccat)               # both layers, one EUP pass
        if t == 0:
            # layer-1 state must stay zero until its first real step (t == 1)
            ccat = jnp.where(keep_l0, ccat, 0.0)
            h_f32 = jnp.where(keep_l0, h_f32, 0.0)
        hcat = h_f32.astype(bf16)

    # fc(H -> 1) + sigmoid as a lane reduction (no N=1 MXU pass)
    h2 = h_f32[:, H:2 * H]
    logits = jnp.sum(h2 * fcw, axis=-1, keepdims=True) + fcb
    out_ref[...] = jax.nn.sigmoid(logits).astype(out_ref.dtype)


def prepare_params(params):
    """One-time packing: gate-interleaved fused weights (bf16) + small f32 table."""
    H = params["whh0"].shape[0]
    Din = params["wih0"].shape[0]

    def interleave(a, b):
        # a, b: (R, 4H) with gate blocks [i,f,g,o] -> (R, 8H) blocks
        # [a_i, b_i, a_f, b_f, a_g, b_g, a_o, b_o]
        R = a.shape[0]
        return jnp.stack([a.reshape(R, 4, H), b.reshape(R, 4, H)],
                         axis=2).reshape(R, 8 * H)

    zeros_din = jnp.zeros((Din, 4 * H), jnp.float32)
    zeros_h = jnp.zeros((H, 4 * H), jnp.float32)

    wx = interleave(params["wih0"], zeros_din)                         # (Din, 8H)
    wr = jnp.concatenate(
        [interleave(params["whh0"], params["wih1"]),                   # h1 rows
         interleave(zeros_h, params["whh1"])], axis=0)                 # h2 rows
    w_all = jnp.concatenate([wx, wr], axis=0).astype(jnp.bfloat16)     # (Din+2H, 8H)

    bfused = interleave(params["b0"], params["b1"])                    # (1, 8H)
    misc = jnp.zeros((3, 8 * H), jnp.float32)
    misc = misc.at[0, :].set(bfused[0])
    misc = misc.at[1, :H].set(params["fcw"][:, 0])
    misc = misc.at[2, 0].set(params["fcb"][0, 0])
    return {"w_all": w_all, "misc": misc}


@jax.jit
def teacher_model_forward(x, prepped):
    """x: (B, T, Din) batch-first f32; prepped from prepare_params(). Returns (B, 1)."""
    w_all, misc = prepped["w_all"], prepped["misc"]
    B, T, Din = x.shape
    H = misc.shape[1] // 8

    # pad batch to a multiple of 8 and go time-major; these tiny layout ops run
    # under this jit so they fuse with the surrounding program.
    B_pad = max(8, ((B + 7) // 8) * 8)
    if B_pad != B:
        x = jnp.pad(x, ((0, B_pad - B), (0, 0), (0, 0)))
    x_tm = jnp.transpose(x, (1, 0, 2))                        # (T, B_pad, Din)

    vmem = pl.BlockSpec(memory_space=pltpu.MemorySpace.VMEM)
    kernel = functools.partial(_teacher_kernel, hidden_size=H, seq_len=T,
                               batch=B_pad, input_size=Din)
    out = pl.pallas_call(
        kernel,
        out_shape=jax.ShapeDtypeStruct((B_pad, 1), jnp.float32),
        in_specs=[vmem, vmem, vmem],
        out_specs=vmem,
    )(x_tm, w_all, misc)
    return out[:B]


def init_params(key, input_size, hidden_size):
    """Deterministic synthetic params, PyTorch-style uniform(-1/sqrt(H), 1/sqrt(H))."""
    H = hidden_size
    bound = 1.0 / jnp.sqrt(jnp.float32(H))
    keys = jax.random.split(key, 12)

    def u(k, shape):
        return jax.random.uniform(k, shape, jnp.float32, -bound, bound)

    # layer 0
    w_ih_l0 = u(keys[0], (4 * H, input_size))
    w_hh_l0 = u(keys[1], (4 * H, H))
    b_ih_l0 = u(keys[2], (4 * H,))
    b_hh_l0 = u(keys[3], (4 * H,))
    # layer 1
    w_ih_l1 = u(keys[4], (4 * H, H))
    w_hh_l1 = u(keys[5], (4 * H, H))
    b_ih_l1 = u(keys[6], (4 * H,))
    b_hh_l1 = u(keys[7], (4 * H,))
    # fc
    fc_w = u(keys[8], (1, H))
    fc_b = u(keys[9], (1,))

    return {
        "wih0": w_ih_l0.T,                               # (Din, 4H)
        "whh0": w_hh_l0.T,                               # (H, 4H)
        "b0": (b_ih_l0 + b_hh_l0)[None, :],              # (1, 4H)
        "wih1": w_ih_l1.T,                               # (H, 4H)
        "whh1": w_hh_l1.T,                               # (H, 4H)
        "b1": (b_ih_l1 + b_hh_l1)[None, :],              # (1, 4H)
        "fcw": fc_w.T,                                   # (H, 1)
        "fcb": fc_b[None, :],                            # (1, 1)
    }


def teacher_model_reference(x, params):
    """Pure-JAX f32 reference of the same forward pass (for validation)."""
    B, T, Din = x.shape
    H = params["whh0"].shape[0]

    def cell(x_t, h, c, wih, whh, b):
        z = x_t @ wih + h @ whh + b
        i = jax.nn.sigmoid(z[:, 0 * H:1 * H])
        f = jax.nn.sigmoid(z[:, 1 * H:2 * H])
        g = jnp.tanh(z[:, 2 * H:3 * H])
        o = jax.nn.sigmoid(z[:, 3 * H:4 * H])
        c = f * c + i * g
        h = o * jnp.tanh(c)
        return h, c

    def step(carry, x_t):
        h1, c1, h2, c2 = carry
        h1, c1 = cell(x_t, h1, c1, params["wih0"], params["whh0"], params["b0"])
        h2, c2 = cell(h1, h2, c2, params["wih1"], params["whh1"], params["b1"])
        return (h1, c1, h2, c2), None

    zeros = jnp.zeros((B, H), jnp.float32)
    (_, _, h2, _), _ = lax.scan(step, (zeros, zeros, zeros, zeros),
                                jnp.transpose(x, (1, 0, 2)))
    return jax.nn.sigmoid(h2 @ params["fcw"] + params["fcb"])


if __name__ == "__main__":
    # Small shapes consistent with the module: batch=2, seq=8, input_size=16, hidden=32
    B, T, Din, H = 2, 8, 16, 32

    key = jax.random.PRNGKey(0)
    k_x, k_p = jax.random.split(key)
    x = jax.random.normal(k_x, (B, T, Din), jnp.float32)
    params = init_params(k_p, Din, H)
    prepped = prepare_params(params)

    out = teacher_model_forward(x, prepped)
    out = jax.block_until_ready(out)

    ref = teacher_model_reference(x, params)
    assert out.shape == (B, 1)
    # bf16 MXU operands (f32 accumulation) -> slightly looser tolerance than f32.
    assert jnp.allclose(out, ref, atol=2e-2, rtol=2e-2), (out, ref)

    print("KERNEL_OK")
</pallas_src>

<mosaic_0001>
module attributes {stable_mosaic.version = 11 : i64} {
  func.func @_teacher_kernel(%arg0: memref<8x8x16xf32, #tpu.memory_space<vmem>>, %arg1: memref<80x256xbf16, #tpu.memory_space<vmem>>, %arg2: memref<3x256xf32, #tpu.memory_space<vmem>>, %arg3: memref<8x1xf32, #tpu.memory_space<vmem>>) attributes {dimension_semantics = [], scalar_prefetch = 0 : i64, scratch_operands = 0 : i64, tpu.core_type = #tpu.core_type<tc>} {
    %c0 = arith.constant 0 : index
    %c0_0 = arith.constant 0 : index
    %0 = vector.load %arg1[%c0, %c0_0] : memref<80x256xbf16, #tpu.memory_space<vmem>>, vector<16x256xbf16>
    %c16 = arith.constant 16 : index
    %c0_1 = arith.constant 0 : index
    %1 = vector.load %arg1[%c16, %c0_1] : memref<80x256xbf16, #tpu.memory_space<vmem>>, vector<64x256xbf16>
    %c0_2 = arith.constant 0 : index
    %c0_3 = arith.constant 0 : index
    %2 = vector.load %arg2[%c0_2, %c0_3] : memref<3x256xf32, #tpu.memory_space<vmem>>, vector<1x256xf32>
    %c1 = arith.constant 1 : index
    %c0_4 = arith.constant 0 : index
    %3 = vector.load %arg2[%c1, %c0_4] : memref<3x256xf32, #tpu.memory_space<vmem>>, vector<1x32xf32>
    %c2 = arith.constant 2 : index
    %c0_5 = arith.constant 0 : index
    %4 = vector.load %arg2[%c2, %c0_5] : memref<3x256xf32, #tpu.memory_space<vmem>>, vector<1x1xf32>
    %c0_6 = arith.constant 0 : index
    %c0_7 = arith.constant 0 : index
    %c0_8 = arith.constant 0 : index
    %5 = vector.load %arg0[%c0_6, %c0_7, %c0_8] : memref<8x8x16xf32, #tpu.memory_space<vmem>>, vector<8x8x16xf32>
    %6 = vector.shape_cast %5 : vector<8x8x16xf32> to vector<64x16xf32>
    %7 = arith.truncf %6 : vector<64x16xf32> to vector<64x16xbf16>
    %cst = arith.constant dense<0.000000e+00> : vector<64x256xf32>
    %8 = tpu.matmul %7, %0, %cst {dimension_numbers = #tpu.dot_dimension_numbers<[1], [0], [0], [1], [0, 0, 1, 1], [], []>} : vector<64x16xbf16>, vector<16x256xbf16>, vector<64x256xf32> -> vector<64x256xf32>
    %9 = vector.broadcast %2 : vector<1x256xf32> to vector<64x256xf32>
    %10 = arith.addf %8, %9 : vector<64x256xf32>
    %11 = tpu.iota {dimensions = array<i32: 1>} : vector<8x256xi32>
    %c128_i32 = arith.constant 128 : i32
    %12 = vector.broadcast %c128_i32 : i32 to vector<8x256xi32>
    %13 = arith.cmpi sge, %11, %12 : vector<8x256xi32>
    %c192_i32 = arith.constant 192 : i32
    %14 = vector.broadcast %c192_i32 : i32 to vector<8x256xi32>
    %15 = arith.cmpi slt, %11, %14 : vector<8x256xi32>
    %16 = arith.andi %13, %15 : vector<8x256xi1>
    %cst_9 = arith.constant 1.000000e+00 : f32
    %cst_10 = arith.constant 5.000000e-01 : f32
    %17 = vector.broadcast %cst_9 : f32 to vector<8x256xf32>
    %18 = vector.broadcast %cst_10 : f32 to vector<8x256xf32>
    %19 = arith.select %16, %17, %18 : vector<8x256xi1>, vector<8x256xf32>
    %cst_11 = arith.constant 0.000000e+00 : f32
    %cst_12 = arith.constant 5.000000e-01 : f32
    %20 = vector.broadcast %cst_11 : f32 to vector<8x256xf32>
    %21 = vector.broadcast %cst_12 : f32 to vector<8x256xf32>
    %22 = arith.select %16, %20, %21 : vector<8x256xi1>, vector<8x256xf32>
    %23 = tpu.iota {dimensions = array<i32: 1>} : vector<8x64xi32>
    %c32_i32 = arith.constant 32 : i32
    %24 = vector.broadcast %c32_i32 : i32 to vector<8x64xi32>
    %25 = arith.cmpi slt, %23, %24 : vector<8x64xi32>
    %cst_13 = arith.constant 0.000000e+00 : f32
    %26 = vector.broadcast %cst_13 : f32 to vector<8x64xf32>
    %27 = vector.extract_strided_slice %10 {offsets = [0, 0], sizes = [8, 256], strides = [1, 1]} : vector<64x256xf32> to vector<8x256xf32>
    %28 = arith.mulf %27, %19 : vector<8x256xf32>
    %29 = math.tanh %28 : vector<8x256xf32>
    %30 = arith.mulf %29, %19 : vector<8x256xf32>
    %31 = arith.addf %30, %22 : vector<8x256xf32>
    %32 = vector.extract_strided_slice %31 {offsets = [0, 0], sizes = [8, 64], strides = [1, 1]} : vector<8x256xf32> to vector<8x64xf32>
    %33 = vector.extract_strided_slice %31 {offsets = [0, 64], sizes = [8, 64], strides = [1, 1]} : vector<8x256xf32> to vector<8x64xf32>
    %34 = vector.extract_strided_slice %31 {offsets = [0, 128], sizes = [8, 64], strides = [1, 1]} : vector<8x256xf32> to vector<8x64xf32>
    %35 = vector.extract_strided_slice %31 {offsets = [0, 192], sizes = [8, 64], strides = [1, 1]} : vector<8x256xf32> to vector<8x64xf32>
    %36 = arith.mulf %33, %26 : vector<8x64xf32>
    %37 = arith.mulf %32, %34 : vector<8x64xf32>
    %38 = arith.addf %36, %37 : vector<8x64xf32>
    %39 = math.tanh %38 : vector<8x64xf32>
    %40 = arith.mulf %35, %39 : vector<8x64xf32>
    %cst_14 = arith.constant 0.000000e+00 : f32
    %41 = vector.broadcast %cst_14 : f32 to vector<8x64xf32>
    %42 = arith.select %25, %38, %41 : vector<8x64xi1>, vector<8x64xf32>
    %cst_15 = arith.constant 0.000000e+00 : f32
    %43 = vector.broadcast %cst_15 : f32 to vector<8x64xf32>
    %44 = arith.select %25, %40, %43 : vector<8x64xi1>, vector<8x64xf32>
    %45 = arith.truncf %44 : vector<8x64xf32> to vector<8x64xbf16>
    %cst_16 = arith.constant dense<0.000000e+00> : vector<8x256xf32>
    %46 = tpu.matmul %45, %1, %cst_16 {dimension_numbers = #tpu.dot_dimension_numbers<[1], [0], [0], [1], [0, 0, 1, 1], [], []>} : vector<8x64xbf16>, vector<64x256xbf16>, vector<8x256xf32> -> vector<8x256xf32>
    %47 = vector.extract_strided_slice %10 {offsets = [8, 0], sizes = [8, 256], strides = [1, 1]} : vector<64x256xf32> to vector<8x256xf32>
    %48 = arith.addf %46, %47 : vector<8x256xf32>
    %49 = arith.mulf %48, %19 : vector<8x256xf32>
    %50 = math.tanh %49 : vector<8x256xf32>
    %51 = arith.mulf %50, %19 : vector<8x256xf32>
    %52 = arith.addf %51, %22 : vector<8x256xf32>
    %53 = vector.extract_strided_slice %52 {offsets = [0, 0], sizes = [8, 64], strides = [1, 1]} : vector<8x256xf32> to vector<8x64xf32>
    %54 = vector.extract_strided_slice %52 {offsets = [0, 64], sizes = [8, 64], strides = [1, 1]} : vector<8x256xf32> to vector<8x64xf32>
    %55 = vector.extract_strided_slice %52 {offsets = [0, 128], sizes = [8, 64], strides = [1, 1]} : vector<8x256xf32> to vector<8x64xf32>
    %56 = vector.extract_strided_slice %52 {offsets = [0, 192], sizes = [8, 64], strides = [1, 1]} : vector<8x256xf32> to vector<8x64xf32>
    %57 = arith.mulf %54, %42 : vector<8x64xf32>
    %58 = arith.mulf %53, %55 : vector<8x64xf32>
    %59 = arith.addf %57, %58 : vector<8x64xf32>
    %60 = math.tanh %59 : vector<8x64xf32>
    %61 = arith.mulf %56, %60 : vector<8x64xf32>
    %62 = arith.truncf %61 : vector<8x64xf32> to vector<8x64xbf16>
    %cst_17 = arith.constant dense<0.000000e+00> : vector<8x256xf32>
    %63 = tpu.matmul %62, %1, %cst_17 {dimension_numbers = #tpu.dot_dimension_numbers<[1], [0], [0], [1], [0, 0, 1, 1], [], []>} : vector<8x64xbf16>, vector<64x256xbf16>, vector<8x256xf32> -> vector<8x256xf32>
    %64 = vector.extract_strided_slice %10 {offsets = [16, 0], sizes = [8, 256], strides = [1, 1]} : vector<64x256xf32> to vector<8x256xf32>
    %65 = arith.addf %63, %64 : vector<8x256xf32>
    %66 = arith.mulf %65, %19 : vector<8x256xf32>
    %67 = math.tanh %66 : vector<8x256xf32>
    %68 = arith.mulf %67, %19 : vector<8x256xf32>
    %69 = arith.addf %68, %22 : vector<8x256xf32>
    %70 = vector.extract_strided_slice %69 {offsets = [0, 0], sizes = [8, 64], strides = [1, 1]} : vector<8x256xf32> to vector<8x64xf32>
    %71 = vector.extract_strided_slice %69 {offsets = [0, 64], sizes = [8, 64], strides = [1, 1]} : vector<8x256xf32> to vector<8x64xf32>
    %72 = vector.extract_strided_slice %69 {offsets = [0, 128], sizes = [8, 64], strides = [1, 1]} : vector<8x256xf32> to vector<8x64xf32>
    %73 = vector.extract_strided_slice %69 {offsets = [0, 192], sizes = [8, 64], strides = [1, 1]} : vector<8x256xf32> to vector<8x64xf32>
    %74 = arith.mulf %71, %59 : vector<8x64xf32>
    %75 = arith.mulf %70, %72 : vector<8x64xf32>
    %76 = arith.addf %74, %75 : vector<8x64xf32>
    %77 = math.tanh %76 : vector<8x64xf32>
    %78 = arith.mulf %73, %77 : vector<8x64xf32>
    %79 = arith.truncf %78 : vector<8x64xf32> to vector<8x64xbf16>
    %cst_18 = arith.constant dense<0.000000e+00> : vector<8x256xf32>
    %80 = tpu.matmul %79, %1, %cst_18 {dimension_numbers = #tpu.dot_dimension_numbers<[1], [0], [0], [1], [0, 0, 1, 1], [], []>} : vector<8x64xbf16>, vector<64x256xbf16>, vector<8x256xf32> -> vector<8x256xf32>
    %81 = vector.extract_strided_slice %10 {offsets = [24, 0], sizes = [8, 256], strides = [1, 1]} : vector<64x256xf32> to vector<8x256xf32>
    %82 = arith.addf %80, %81 : vector<8x256xf32>
    %83 = arith.mulf %82, %19 : vector<8x256xf32>
    %84 = math.tanh %83 : vector<8x256xf32>
    %85 = arith.mulf %84, %19 : vector<8x256xf32>
    %86 = arith.addf %85, %22 : vector<8x256xf32>
    %87 = vector.extract_strided_slice %86 {offsets = [0, 0], sizes = [8, 64], strides = [1, 1]} : vector<8x256xf32> to vector<8x64xf32>
    %88 = vector.extract_strided_slice %86 {offsets = [0, 64], sizes = [8, 64], strides = [1, 1]} : vector<8x256xf32> to vector<8x64xf32>
    %89 = vector.extract_strided_slice %86 {offsets = [0, 128], sizes = [8, 64], strides = [1, 1]} : vector<8x256xf32> to vector<8x64xf32>
    %90 = vector.extract_strided_slice %86 {offsets = [0, 192], sizes = [8, 64], strides = [1, 1]} : vector<8x256xf32> to vector<8x64xf32>
    %91 = arith.mulf %88, %76 : vector<8x64xf32>
    %92 = arith.mulf %87, %89 : vector<8x64xf32>
    %93 = arith.addf %91, %92 : vector<8x64xf32>
    %94 = math.tanh %93 : vector<8x64xf32>
    %95 = arith.mulf %90, %94 : vector<8x64xf32>
    %96 = arith.truncf %95 : vector<8x64xf32> to vector<8x64xbf16>
    %cst_19 = arith.constant dense<0.000000e+00> : vector<8x256xf32>
    %97 = tpu.matmul %96, %1, %cst_19 {dimension_numbers = #tpu.dot_dimension_numbers<[1], [0], [0], [1], [0, 0, 1, 1], [], []>} : vector<8x64xbf16>, vector<64x256xbf16>, vector<8x256xf32> -> vector<8x256xf32>
    %98 = vector.extract_strided_slice %10 {offsets = [32, 0], sizes = [8, 256], strides = [1, 1]} : vector<64x256xf32> to vector<8x256xf32>
    %99 = arith.addf %97, %98 : vector<8x256xf32>
    %100 = arith.mulf %99, %19 : vector<8x256xf32>
    %101 = math.tanh %100 : vector<8x256xf32>
    %102 = arith.mulf %101, %19 : vector<8x256xf32>
    %103 = arith.addf %102, %22 : vector<8x256xf32>
    %104 = vector.extract_strided_slice %103 {offsets = [0, 0], sizes = [8, 64], strides = [1, 1]} : vector<8x256xf32> to vector<8x64xf32>
    %105 = vector.extract_strided_slice %103 {offsets = [0, 64], sizes = [8, 64], strides = [1, 1]} : vector<8x256xf32> to vector<8x64xf32>
    %106 = vector.extract_strided_slice %103 {offsets = [0, 128], sizes = [8, 64], strides = [1, 1]} : vector<8x256xf32> to vector<8x64xf32>
    %107 = vector.extract_strided_slice %103 {offsets = [0, 192], sizes = [8, 64], strides = [1, 1]} : vector<8x256xf32> to vector<8x64xf32>
    %108 = arith.mulf %105, %93 : vector<8x64xf32>
    %109 = arith.mulf %104, %106 : vector<8x64xf32>
    %110 = arith.addf %108, %109 : vector<8x64xf32>
    %111 = math.tanh %110 : vector<8x64xf32>
    %112 = arith.mulf %107, %111 : vector<8x64xf32>
    %113 = arith.truncf %112 : vector<8x64xf32> to vector<8x64xbf16>
    %cst_20 = arith.constant dense<0.000000e+00> : vector<8x256xf32>
    %114 = tpu.matmul %113, %1, %cst_20 {dimension_numbers = #tpu.dot_dimension_numbers<[1], [0], [0], [1], [0, 0, 1, 1], [], []>} : vector<8x64xbf16>, vector<64x256xbf16>, vector<8x256xf32> -> vector<8x256xf32>
    %115 = vector.extract_strided_slice %10 {offsets = [40, 0], sizes = [8, 256], strides = [1, 1]} : vector<64x256xf32> to vector<8x256xf32>
    %116 = arith.addf %114, %115 : vector<8x256xf32>
    %117 = arith.mulf %116, %19 : vector<8x256xf32>
    %118 = math.tanh %117 : vector<8x256xf32>
    %119 = arith.mulf %118, %19 : vector<8x256xf32>
    %120 = arith.addf %119, %22 : vector<8x256xf32>
    %121 = vector.extract_strided_slice %120 {offsets = [0, 0], sizes = [8, 64], strides = [1, 1]} : vector<8x256xf32> to vector<8x64xf32>
    %122 = vector.extract_strided_slice %120 {offsets = [0, 64], sizes = [8, 64], strides = [1, 1]} : vector<8x256xf32> to vector<8x64xf32>
    %123 = vector.extract_strided_slice %120 {offsets = [0, 128], sizes = [8, 64], strides = [1, 1]} : vector<8x256xf32> to vector<8x64xf32>
    %124 = vector.extract_strided_slice %120 {offsets = [0, 192], sizes = [8, 64], strides = [1, 1]} : vector<8x256xf32> to vector<8x64xf32>
    %125 = arith.mulf %122, %110 : vector<8x64xf32>
    %126 = arith.mulf %121, %123 : vector<8x64xf32>
    %127 = arith.addf %125, %126 : vector<8x64xf32>
    %128 = math.tanh %127 : vector<8x64xf32>
    %129 = arith.mulf %124, %128 : vector<8x64xf32>
    %130 = arith.truncf %129 : vector<8x64xf32> to vector<8x64xbf16>
    %cst_21 = arith.constant dense<0.000000e+00> : vector<8x256xf32>
    %131 = tpu.matmul %130, %1, %cst_21 {dimension_numbers = #tpu.dot_dimension_numbers<[1], [0], [0], [1], [0, 0, 1, 1], [], []>} : vector<8x64xbf16>, vector<64x256xbf16>, vector<8x256xf32> -> vector<8x256xf32>
    %132 = vector.extract_strided_slice %10 {offsets = [48, 0], sizes = [8, 256], strides = [1, 1]} : vector<64x256xf32> to vector<8x256xf32>
    %133 = arith.addf %131, %132 : vector<8x256xf32>
    %134 = arith.mulf %133, %19 : vector<8x256xf32>
    %135 = math.tanh %134 : vector<8x256xf32>
    %136 = arith.mulf %135, %19 : vector<8x256xf32>
    %137 = arith.addf %136, %22 : vector<8x256xf32>
    %138 = vector.extract_strided_slice %137 {offsets = [0, 0], sizes = [8, 64], strides = [1, 1]} : vector<8x256xf32> to vector<8x64xf32>
    %139 = vector.extract_strided_slice %137 {offsets = [0, 64], sizes = [8, 64], strides = [1, 1]} : vector<8x256xf32> to vector<8x64xf32>
    %140 = vector.extract_strided_slice %137 {offsets = [0, 128], sizes = [8, 64], strides = [1, 1]} : vector<8x256xf32> to vector<8x64xf32>
    %141 = vector.extract_strided_slice %137 {offsets = [0, 192], sizes = [8, 64], strides = [1, 1]} : vector<8x256xf32> to vector<8x64xf32>
    %142 = arith.mulf %139, %127 : vector<8x64xf32>
    %143 = arith.mulf %138, %140 : vector<8x64xf32>
    %144 = arith.addf %142, %143 : vector<8x64xf32>
    %145 = math.tanh %144 : vector<8x64xf32>
    %146 = arith.mulf %141, %145 : vector<8x64xf32>
    %147 = arith.truncf %146 : vector<8x64xf32> to vector<8x64xbf16>
    %cst_22 = arith.constant dense<0.000000e+00> : vector<8x256xf32>
    %148 = tpu.matmul %147, %1, %cst_22 {dimension_numbers = #tpu.dot_dimension_numbers<[1], [0], [0], [1], [0, 0, 1, 1], [], []>} : vector<8x64xbf16>, vector<64x256xbf16>, vector<8x256xf32> -> vector<8x256xf32>
    %149 = vector.extract_strided_slice %10 {offsets = [56, 0], sizes = [8, 256], strides = [1, 1]} : vector<64x256xf32> to vector<8x256xf32>
    %150 = arith.addf %148, %149 : vector<8x256xf32>
    %151 = arith.mulf %150, %19 : vector<8x256xf32>
    %152 = math.tanh %151 : vector<8x256xf32>
    %153 = arith.mulf %152, %19 : vector<8x256xf32>
    %154 = arith.addf %153, %22 : vector<8x256xf32>
    %155 = vector.extract_strided_slice %154 {offsets = [0, 0], sizes = [8, 64], strides = [1, 1]} : vector<8x256xf32> to vector<8x64xf32>
    %156 = vector.extract_strided_slice %154 {offsets = [0, 64], sizes = [8, 64], strides = [1, 1]} : vector<8x256xf32> to vector<8x64xf32>
    %157 = vector.extract_strided_slice %154 {offsets = [0, 128], sizes = [8, 64], strides = [1, 1]} : vector<8x256xf32> to vector<8x64xf32>
    %158 = vector.extract_strided_slice %154 {offsets = [0, 192], sizes = [8, 64], strides = [1, 1]} : vector<8x256xf32> to vector<8x64xf32>
    %159 = arith.mulf %156, %144 : vector<8x64xf32>
    %160 = arith.mulf %155, %157 : vector<8x64xf32>
    %161 = arith.addf %159, %160 : vector<8x64xf32>
    %162 = math.tanh %161 : vector<8x64xf32>
    %163 = arith.mulf %158, %162 : vector<8x64xf32>
    %164 = arith.truncf %163 : vector<8x64xf32> to vector<8x64xbf16>
    %cst_23 = arith.constant dense<0.000000e+00> : vector<8x256xf32>
    %165 = tpu.matmul %164, %1, %cst_23 {dimension_numbers = #tpu.dot_dimension_numbers<[1], [0], [0], [1], [0, 0, 1, 1], [], []>} : vector<8x64xbf16>, vector<64x256xbf16>, vector<8x256xf32> -> vector<8x256xf32>
    %166 = vector.broadcast %2 : vector<1x256xf32> to vector<8x256xf32>
    %167 = arith.addf %165, %166 : vector<8x256xf32>
    %168 = arith.mulf %167, %19 : vector<8x256xf32>
    %169 = math.tanh %168 : vector<8x256xf32>
    %170 = arith.mulf %169, %19 : vector<8x256xf32>
    %171 = arith.addf %170, %22 : vector<8x256xf32>
    %172 = vector.extract_strided_slice %171 {offsets = [0, 0], sizes = [8, 64], strides = [1, 1]} : vector<8x256xf32> to vector<8x64xf32>
    %173 = vector.extract_strided_slice %171 {offsets = [0, 64], sizes = [8, 64], strides = [1, 1]} : vector<8x256xf32> to vector<8x64xf32>
    %174 = vector.extract_strided_slice %171 {offsets = [0, 128], sizes = [8, 64], strides = [1, 1]} : vector<8x256xf32> to vector<8x64xf32>
    %175 = vector.extract_strided_slice %171 {offsets = [0, 192], sizes = [8, 64], strides = [1, 1]} : vector<8x256xf32> to vector<8x64xf32>
    %176 = arith.mulf %173, %161 : vector<8x64xf32>
    %177 = arith.mulf %172, %174 : vector<8x64xf32>
    %178 = arith.addf %176, %177 : vector<8x64xf32>
    %179 = math.tanh %178 : vector<8x64xf32>
    %180 = arith.mulf %175, %179 : vector<8x64xf32>
    %181 = vector.extract_strided_slice %180 {offsets = [0, 32], sizes = [8, 32], strides = [1, 1]} : vector<8x64xf32> to vector<8x32xf32>
    %182 = vector.broadcast %3 : vector<1x32xf32> to vector<8x32xf32>
    %183 = arith.mulf %181, %182 : vector<8x32xf32>
    %cst_24 = arith.constant dense<0.000000e+00> : vector<8xf32>
    %184 = vector.multi_reduction <add>, %183, %cst_24 [1] : vector<8x32xf32> to vector<8xf32>
    %185 = vector.shape_cast %184 : vector<8xf32> to vector<8x1xf32>
    %186 = vector.broadcast %4 : vector<1x1xf32> to vector<8x1xf32>
    %187 = arith.addf %185, %186 : vector<8x1xf32>
    %188 = arith.negf %187 : vector<8x1xf32>
    %189 = math.exp %188 : vector<8x1xf32>
    %cst_25 = arith.constant 1.000000e+00 : f32
    %190 = vector.broadcast %cst_25 : f32 to vector<8x1xf32>
    %191 = arith.addf %190, %189 : vector<8x1xf32>
    %192 = arith.divf %190, %191 : vector<8x1xf32>
    %c0_26 = arith.constant 0 : index
    %c0_27 = arith.constant 0 : index
    %193 = vector.load %arg3[%c0_26, %c0_27] : memref<8x1xf32, #tpu.memory_space<vmem>>, vector<8x1xf32>
    tpu.vector_store %arg3[%c0_26, %c0_27], %192 {strides = array<i32>} : memref<8x1xf32, #tpu.memory_space<vmem>>, vector<8x1xf32>,
    return
  }
}

</mosaic_0001>

<llo_original>
// kernel: teacher_model_forward.1
$region0: #{teacher_model_forward.1}
  #allocation0 [shape = 'u32[]', space=smem, size = 0x4, offset = 0x4, fixed_abs, tag = 'smem constant byte address 0x4 - core index']
  #allocation1 [shape = 'u32[144,128]{1,0:T(1,128)}', space=vmem, size = 0x12000, scoped, tag = 'internal scratch']
  %s0 = inlined_call_operand.vmem [shape: f32[8,8,16], index: 0, kind: input, shape index: {}]
  %s1 = inlined_call_operand.vmem [shape: bf16[80,256], index: 1, kind: input, shape index: {}]
  %s2 = inlined_call_operand.vmem [shape: f32[3,256], index: 2, kind: input, shape index: {}]
  %s3 = inlined_call_operand.vmem [shape: f32[8,1], index: 3, kind: output, shape index: {}]
  %s4 = sld [smem:[#allocation0]]
  $region22: #{teacher_model_forward.1} parent=0
    _
  %s6 = ssub.s32 1, %s4
  %s7 = scalar_select 0, %s6, %s4
  // Predicated region
  $region2: #{teacher_model_forward.1} parent=0 // pred_check
    _
  $region3: #{teacher_model_forward.1} parent=0 // pred_check_branch
    %9 = sbr.rel (0) target = $region5
  $region4: #{teacher_model_forward.1} parent=0 // pred_region
    _
  $region5: #{teacher_model_forward.1} parent=0 // pred_fallthru
    _
  // Predicated region
  $region6: #{teacher_model_forward.1} parent=0 // pred_check
    _
  $region7: #{teacher_model_forward.1} parent=0 // pred_check_branch
    %11 = sbr.rel (0) target = $region9
  $region8: #{teacher_model_forward.1} parent=0 // pred_region
    _
  $region9: #{teacher_model_forward.1} parent=0 // pred_fallthru
    _
  // Predicated region
  $region10: #{teacher_model_forward.1} parent=0 // pred_check
    _
  $region11: #{teacher_model_forward.1} parent=0 // pred_check_branch
    %13 = sbr.rel (0) target = $region13
  $region12: #{teacher_model_forward.1} parent=0 // pred_region
    _
  $region13: #{teacher_model_forward.1} parent=0 // pred_fallthru
    _
  %v15 = vld [vmem:[%s1] sm:$0xff]
  %v16 = vld [vmem:[%s1 + $0x8] sm:$0xff]
  %v17 = vld [vmem:[%s1 + $0x10] sm:$0xff]
  %v18 = vld [vmem:[%s1 + $0x18] sm:$0xff]
  %v19 = vld [vmem:[%s1 + $0x20] sm:$0xff]
  %v20 = vld [vmem:[%s1 + $0x28] sm:$0xff]
  %v21 = vld [vmem:[%s1 + $0x30] sm:$0xff]
  %v22 = vld [vmem:[%s1 + $0x38] sm:$0xff]
  %v23 = vld [vmem:[%s1 + $0x40] sm:$0xff]
  %v24 = vld [vmem:[%s1 + $0x48] sm:$0xff]
  %v25 = vld [vmem:[%s2] ss:$4 sm:$0x3]
  %v26 = vld [vmem:[%s2 + $0x1] sm:$0x1]
  %v27 = vld [vmem:[%s2 + $0x2] sm:$0x1]
  %v28 = vld [vmem:[%s0] sm:$0xff]
  %v29 = vld [vmem:[%s0 + $0x8] sm:$0xff]
  %v30 = vld [vmem:[%s0 + $0x10] sm:$0xff]
  %v31 = vld [vmem:[%s0 + $0x18] sm:$0xff]
  %v32 = vld [vmem:[%s0 + $0x20] sm:$0xff]
  %v33 = vld [vmem:[%s0 + $0x28] sm:$0xff]
  %v34 = vld [vmem:[%s0 + $0x30] sm:$0xff]
  %v35 = vld [vmem:[%s0 + $0x38] sm:$0xff]
  %v36 = vpack.c.bf16 %v29, %v28
  %v37 = vpack.c.bf16 %v31, %v30
  %v38 = vpack.c.bf16 %v33, %v32
  %v39 = vpack.c.bf16 %v35, %v34
  %v41 = vlaneseq
  %v42 = vshrl.u32 %v41, 7
  %v43 = vsub.s32 0, %v42
  %v44 = vrot.slane %v25, %v43
  %v45 = vlaneseq
  %v46 = vshrl.u32 %v45, 7
  %v47 = vsub.s32 1, %v46
  %v48 = vrot.slane %v25, %v47
  %v53 = vunpack.c.l.b16 %v15
  %v54 = vunpack.c.h.b16 %v15
  %v55 = vunpack.c.l.b16 %v16
  %v56 = vunpack.c.h.b16 %v16
  %v57 = vpack.c.b16 %v55, %v53
  %v58 = vpack.c.b16 %v56, %v54
  %vm61 = vcmask 130048
  %v63 = vsel %vm61, %v36, 0
  %v66 = vsel %vm61, %v37, 0
  %v69 = vsel %vm61, %v38, 0
  %v72 = vsel %vm61, %v39, 0
  %74 = vmatprep.subr.bf16.mxu0 %v58
  %75 = vmatpush1.bf16.msra.mxu0 %v57
  %76 = vmatprep.subr.bf16.mxu0 0
  %77 = vmatpush1.bf16.msra.mxu0 0
  %78 = vmatprep.subr.bf16.mxu0 0
  %79 = vmatpush1.bf16.msra.mxu0 0
  %80 = vmatprep.subr.bf16.mxu0 0
  %81 = vmatpush1.bf16.msra.mxu0 0
  %82 = vmatprep.subr.bf16.mxu0 0
  %83 = vmatpush1.bf16.msra.mxu0 0
  %84 = vmatprep.subr.bf16.mxu0 0
  %85 = vmatpush1.bf16.msra.mxu0 0
  %86 = vmatprep.subr.bf16.mxu0 0
  %87 = vmatpush1.bf16.msra.mxu0 0
  %88 = vmatprep.subr.bf16.mxu0 0
  %89 = vmatpush1.bf16.msra.mxu0 0
  %90 = vmatprep.subr.bf16.mxu0 0
  %91 = vmatpush1.bf16.msra.mxu0 0
  %92 = vmatprep.subr.bf16.mxu0 0
  %93 = vmatpush1.bf16.msra.mxu0 0
  %94 = vmatprep.subr.bf16.mxu0 0
  %95 = vmatpush1.bf16.msra.mxu0 0
  %96 = vmatprep.subr.bf16.mxu0 0
  %97 = vmatpush1.bf16.msra.mxu0 0
  %98 = vmatprep.subr.bf16.mxu0 0
  %99 = vmatpush1.bf16.msra.mxu0 0
  %100 = vmatprep.subr.bf16.mxu0 0
  %101 = vmatpush1.bf16.msra.mxu0 0
  %102 = vmatprep.subr.bf16.mxu0 0
  %103 = vmatpush1.bf16.msra.mxu0 0
  %104 = vmatprep.subr.bf16.mxu0 0
  %105 = vmatpush1.bf16.msra.mxu0 0
  %106 = vmatprep.mubr.bf16.mxu0 0
  %107 = vmatmul.mubr.bf16.gmra.mrb[0].mxu0 %v63
  %v108 = vpop.f32.mrb[0].mxu0
  %v109 = vadd.f32 %v44, %v108
  %v110 = vpop.f32.mrb[0].mxu0
  %v111 = vadd.f32 %v48, %v110
  %v112 = vpop.f32.mrb[0].mxu0
  %v113 = vadd.f32 %v44, %v112
  %v114 = vpop.f32.mrb[0].mxu0
  %v115 = vadd.f32 %v48, %v114
  %116 = vmatprep.mubr.bf16.mxu0 0
  %117 = vmatmul.mubr.bf16.gmra.mrb[0].mxu0 %v66
  %v118 = vpop.f32.mrb[0].mxu0
  %v119 = vadd.f32 %v44, %v118
  %v120 = vpop.f32.mrb[0].mxu0
  %v121 = vadd.f32 %v48, %v120
  %v122 = vpop.f32.mrb[0].mxu0
  %v123 = vadd.f32 %v44, %v122
  %v124 = vpop.f32.mrb[0].mxu0
  %v125 = vadd.f32 %v48, %v124
  %126 = vmatprep.mubr.bf16.mxu0 0
  %127 = vmatmul.mubr.bf16.gmra.mrb[0].mxu0 %v69
  %v128 = vpop.f32.mrb[0].mxu0
  %v129 = vadd.f32 %v44, %v128
  %v130 = vpop.f32.mrb[0].mxu0
  %v131 = vadd.f32 %v48, %v130
  %v132 = vpop.f32.mrb[0].mxu0
  %v133 = vadd.f32 %v44, %v132
  %v134 = vpop.f32.mrb[0].mxu0
  %v135 = vadd.f32 %v48, %v134
  %136 = vmatprep.mubr.bf16.mxu0 0
  %137 = vmatmul.mubr.bf16.gmra.mrb[0].mxu0 %v72
  %v138 = vpop.f32.mrb[0].mxu0
  %v139 = vadd.f32 %v44, %v138
  %v140 = vpop.f32.mrb[0].mxu0
  %v141 = vadd.f32 %v48, %v140
  %v142 = vpop.f32.mrb[0].mxu0
  %v143 = vadd.f32 %v44, %v142
  %v144 = vpop.f32.mrb[0].mxu0
  %v145 = vadd.f32 %v48, %v144
  %146 = vdwg.mxu0
  %v147 = vlaneseq
  %v148 = vand.u32 %v147, 127
  %v149 = vadd.s32 %v148, 128
  %vm150 = vcmp.ge.s32.totalorder %v148, 128
  %vm151 = vcmp.ge.s32.totalorder %v149, 128
  %vm152 = vcmp.lt.s32.totalorder %v148, 192
  %vm153 = vcmp.lt.s32.totalorder %v149, 192
  %vm154 = vmand %vm150, %vm152
  %vm155 = vmand %vm151, %vm153
  %v156 = vsel %vm154, 1.0, 0.5
  %v157 = vsel %vm155, 1.0, 0.5
  %v158 = vsel %vm154, 0.0, 0.5
  %v159 = vsel %vm155, 0.0, 0.5
  %vm160 = vcmp.lt.s32.totalorder %v148, 32
  %v161 = vmul.f32 %v109, %v156
  %v162 = vmul.f32 %v111, %v157
  %v163 = vtanh.pop %v161
  %v164 = vtanh.pop %v162
  %v165 = vmul.f32 %v163, %v156
  %v166 = vmul.f32 %v164, %v157
  %v167 = vadd.f32 %v165, %v158
  %v168 = vadd.f32 %v166, %v159
  %v169 = vmul.f32 %v167, 0.0
  %v170 = vmul.f32 %v167, %v168
  %172 = vrot.lane.b32.xlu0 %v170, 64
  %v173 = vpop.permute.xlu0 %172
  %v175 = vadd.f32 %v169, %v173
  %v176 = vtanh.pop %v175
  %v177 = vmul.f32 %v168, %v176
  %179 = vrot.lane.b32.xlu0 %v175, 64
  %v180 = vpop.permute.xlu0 %179
  %v182 = vsel %vm160, %v180, 0.0
  %184 = vrot.lane.b32.xlu0 %v177, 64
  %v185 = vpop.permute.xlu0 %184
  %v187 = vsel %vm160, %v185, 0.0
  %v188 = vpack.c.bf16 %v187, %v187
  %v197 = vunpack.c.l.b16 %v17
  %v198 = vunpack.c.h.b16 %v17
  %v199 = vunpack.c.l.b16 %v18
  %v200 = vunpack.c.h.b16 %v18
  %v201 = vunpack.c.l.b16 %v19
  %v202 = vunpack.c.h.b16 %v19
  %v203 = vunpack.c.l.b16 %v20
  %v204 = vunpack.c.h.b16 %v20
  %v205 = vunpack.c.l.b16 %v21
  %v206 = vunpack.c.h.b16 %v21
  %v207 = vunpack.c.l.b16 %v22
  %v208 = vunpack.c.h.b16 %v22
  %v209 = vunpack.c.l.b16 %v23
  %v210 = vunpack.c.h.b16 %v23
  %v211 = vunpack.c.l.b16 %v24
  %v212 = vunpack.c.h.b16 %v24
  %v213 = vpack.c.b16 %v199, %v197
  %v214 = vpack.c.b16 %v200, %v198
  %v215 = vpack.c.b16 %v203, %v201
  %v216 = vpack.c.b16 %v204, %v202
  %v217 = vpack.c.b16 %v207, %v205
  %v218 = vpack.c.b16 %v208, %v206
  %v219 = vpack.c.b16 %v211, %v209
  %v220 = vpack.c.b16 %v212, %v210
  %vm229 = vcmask 523264
  %v231 = vsel %vm229, %v188, 0
  %233 = vmatprep.subr.bf16.mxu0 %v214
  %234 = vmatpush1.bf16.msra.mxu0 %v213
  %235 = vmatprep.subr.bf16.mxu0 %v216
  %236 = vmatpush1.bf16.msra.mxu0 %v215
  %237 = vmatprep.subr.bf16.mxu0 %v218
  %238 = vmatpush1.bf16.msra.mxu0 %v217
  %239 = vmatprep.subr.bf16.mxu0 %v220
  %240 = vmatpush1.bf16.msra.mxu0 %v219
  %241 = vmatprep.subr.bf16.mxu0 0
  %242 = vmatpush1.bf16.msra.mxu0 0
  %243 = vmatprep.subr.bf16.mxu0 0
  %244 = vmatpush1.bf16.msra.mxu0 0
  %245 = vmatprep.subr.bf16.mxu0 0
  %246 = vmatpush1.bf16.msra.mxu0 0
  %247 = vmatprep.subr.bf16.mxu0 0
  %248 = vmatpush1.bf16.msra.mxu0 0
  %249 = vmatprep.subr.bf16.mxu0 0
  %250 = vmatpush1.bf16.msra.mxu0 0
  %251 = vmatprep.subr.bf16.mxu0 0
  %252 = vmatpush1.bf16.msra.mxu0 0
  %253 = vmatprep.subr.bf16.mxu0 0
  %254 = vmatpush1.bf16.msra.mxu0 0
  %255 = vmatprep.subr.bf16.mxu0 0
  %256 = vmatpush1.bf16.msra.mxu0 0
  %257 = vmatprep.subr.bf16.mxu0 0
  %258 = vmatpush1.bf16.msra.mxu0 0
  %259 = vmatprep.subr.bf16.mxu0 0
  %260 = vmatpush1.bf16.msra.mxu0 0
  %261 = vmatprep.subr.bf16.mxu0 0
  %262 = vmatpush1.bf16.msra.mxu0 0
  %263 = vmatprep.subr.bf16.mxu0 0
  %264 = vmatpush1.bf16.msra.mxu0 0
  %265 = vmatprep.mubr.bf16.mxu0 0
  %266 = vmatmul.mubr.bf16.gmra.mrb[0].mxu0 %v231
  %v267 = vpop.f32.mrb[0].mxu0
  %v268 = vadd.f32 %v113, %v267
  %v269 = vpop.f32.mrb[0].mxu0
  %v270 = vadd.f32 %v115, %v269
  %v271 = vpop.f32.mrb[0].mxu0
  %v272 = vpop.f32.mrb[0].mxu0
  %273 = vdwg.mxu0
  %v274 = vmul.f32 %v268, %v156
  %v275 = vmul.f32 %v270, %v157
  %v276 = vtanh.pop %v274
  %v277 = vtanh.pop %v275
  %v278 = vmul.f32 %v276, %v156
  %v279 = vmul.f32 %v277, %v157
  %v280 = vadd.f32 %v278, %v158
  %v281 = vadd.f32 %v279, %v159
  %283 = vrot.lane.b32.xlu0 %v182, 64
  %v284 = vpop.permute.xlu0 %283
  %v286 = vmul.f32 %v280, %v284
  %v287 = vmul.f32 %v280, %v281
  %289 = vrot.lane.b32.xlu0 %v287, 64
  %v290 = vpop.permute.xlu0 %289
  %v292 = vadd.f32 %v286, %v290
  %v293 = vtanh.pop %v292
  %v294 = vmul.f32 %v281, %v293
  %v295 = vpack.c.bf16 %v294, %v294
  %297 = vrot.lane.b32.xlu0 %v295, 64
  %v298 = vpop.permute.xlu0 %297
  %v300 = vsel %vm229, %v298, 0
  %302 = vmatprep.subr.bf16.mxu0 %v214
  %303 = vmatpush1.bf16.msra.mxu0 %v213
  %304 = vmatprep.subr.bf16.mxu0 %v216
  %305 = vmatpush1.bf16.msra.mxu0 %v215
  %306 = vmatprep.subr.bf16.mxu0 %v218
  %307 = vmatpush1.bf16.msra.mxu0 %v217
  %308 = vmatprep.subr.bf16.mxu0 %v220
  %309 = vmatpush1.bf16.msra.mxu0 %v219
  %310 = vmatprep.subr.bf16.mxu0 0
  %311 = vmatpush1.bf16.msra.mxu0 0
  %312 = vmatprep.subr.bf16.mxu0 0
  %313 = vmatpush1.bf16.msra.mxu0 0
  %314 = vmatprep.subr.bf16.mxu0 0
  %315 = vmatpush1.bf16.msra.mxu0 0
  %316 = vmatprep.subr.bf16.mxu0 0
  %317 = vmatpush1.bf16.msra.mxu0 0
  %318 = vmatprep.subr.bf16.mxu0 0
  %319 = vmatpush1.bf16.msra.mxu0 0
  %320 = vmatprep.subr.bf16.mxu0 0
  %321 = vmatpush1.bf16.msra.mxu0 0
  %322 = vmatprep.subr.bf16.mxu0 0
  %323 = vmatpush1.bf16.msra.mxu0 0
  %324 = vmatprep.subr.bf16.mxu0 0
  %325 = vmatpush1.bf16.msra.mxu0 0
  %326 = vmatprep.subr.bf16.mxu0 0
  %327 = vmatpush1.bf16.msra.mxu0 0
  %328 = vmatprep.subr.bf16.mxu0 0
  %329 = vmatpush1.bf16.msra.mxu0 0
  %330 = vmatprep.subr.bf16.mxu0 0
  %331 = vmatpush1.bf16.msra.mxu0 0
  %332 = vmatprep.subr.bf16.mxu0 0
  %333 = vmatpush1.bf16.msra.mxu0 0
  %334 = vmatprep.mubr.bf16.mxu0 0
  %335 = vmatmul.mubr.bf16.gmra.mrb[0].mxu0 %v300
  %v336 = vpop.f32.mrb[0].mxu0
  %v337 = vadd.f32 %v119, %v336
  %v338 = vpop.f32.mrb[0].mxu0
  %v339 = vadd.f32 %v121, %v338
  %v340 = vpop.f32.mrb[0].mxu0
  %v341 = vpop.f32.mrb[0].mxu0
  %342 = vdwg.mxu0
  %v343 = vmul.f32 %v337, %v156
  %v344 = vmul.f32 %v339, %v157
  %v345 = vtanh.pop %v343
  %v346 = vtanh.pop %v344
  %v347 = vmul.f32 %v345, %v156
  %v348 = vmul.f32 %v346, %v157
  %v349 = vadd.f32 %v347, %v158
  %v350 = vadd.f32 %v348, %v159
  %v351 = vmul.f32 %v349, %v292
  %v352 = vmul.f32 %v349, %v350
  %354 = vrot.lane.b32.xlu0 %v352, 64
  %v355 = vpop.permute.xlu0 %354
  %v357 = vadd.f32 %v351, %v355
  %v358 = vtanh.pop %v357
  %v359 = vmul.f32 %v350, %v358
  %v360 = vpack.c.bf16 %v359, %v359
  %362 = vrot.lane.b32.xlu0 %v360, 64
  %v363 = vpop.permute.xlu0 %362
  %v365 = vsel %vm229, %v363, 0
  %367 = vmatprep.subr.bf16.mxu0 %v214
  %368 = vmatpush1.bf16.msra.mxu0 %v213
  %369 = vmatprep.subr.bf16.mxu0 %v216
  %370 = vmatpush1.bf16.msra.mxu0 %v215
  %371 = vmatprep.subr.bf16.mxu0 %v218
  %372 = vmatpush1.bf16.msra.mxu0 %v217
  %373 = vmatprep.subr.bf16.mxu0 %v220
  %374 = vmatpush1.bf16.msra.mxu0 %v219
  %375 = vmatprep.subr.bf16.mxu0 0
  %376 = vmatpush1.bf16.msra.mxu0 0
  %377 = vmatprep.subr.bf16.mxu0 0
  %378 = vmatpush1.bf16.msra.mxu0 0
  %379 = vmatprep.subr.bf16.mxu0 0
  %380 = vmatpush1.bf16.msra.mxu0 0
  %381 = vmatprep.subr.bf16.mxu0 0
  %382 = vmatpush1.bf16.msra.mxu0 0
  %383 = vmatprep.subr.bf16.mxu0 0
  %384 = vmatpush1.bf16.msra.mxu0 0
  %385 = vmatprep.subr.bf16.mxu0 0
  %386 = vmatpush1.bf16.msra.mxu0 0
  %387 = vmatprep.subr.bf16.mxu0 0
  %388 = vmatpush1.bf16.msra.mxu0 0
  %389 = vmatprep.subr.bf16.mxu0 0
  %390 = vmatpush1.bf16.msra.mxu0 0
  %391 = vmatprep.subr.bf16.mxu0 0
  %392 = vmatpush1.bf16.msra.mxu0 0
  %393 = vmatprep.subr.bf16.mxu0 0
  %394 = vmatpush1.bf16.msra.mxu0 0
  %395 = vmatprep.subr.bf16.mxu0 0
  %396 = vmatpush1.bf16.msra.mxu0 0
  %397 = vmatprep.subr.bf16.mxu0 0
  %398 = vmatpush1.bf16.msra.mxu0 0
  %399 = vmatprep.mubr.bf16.mxu0 0
  %400 = vmatmul.mubr.bf16.gmra.mrb[0].mxu0 %v365
  %v401 = vpop.f32.mrb[0].mxu0
  %v402 = vadd.f32 %v123, %v401
  %v403 = vpop.f32.mrb[0].mxu0
  %v404 = vadd.f32 %v125, %v403
  %v405 = vpop.f32.mrb[0].mxu0
  %v406 = vpop.f32.mrb[0].mxu0
  %407 = vdwg.mxu0
  %v408 = vmul.f32 %v402, %v156
  %v409 = vmul.f32 %v404, %v157
  %v410 = vtanh.pop %v408
  %v411 = vtanh.pop %v409
  %v412 = vmul.f32 %v410, %v156
  %v413 = vmul.f32 %v411, %v157
  %v414 = vadd.f32 %v412, %v158
  %v415 = vadd.f32 %v413, %v159
  %v416 = vmul.f32 %v414, %v357
  %v417 = vmul.f32 %v414, %v415
  %419 = vrot.lane.b32.xlu0 %v417, 64
  %v420 = vpop.permute.xlu0 %419
  %v422 = vadd.f32 %v416, %v420
  %v423 = vtanh.pop %v422
  %v424 = vmul.f32 %v415, %v423
  %v425 = vpack.c.bf16 %v424, %v424
  %427 = vrot.lane.b32.xlu0 %v425, 64
  %v428 = vpop.permute.xlu0 %427
  %v430 = vsel %vm229, %v428, 0
  %432 = vmatprep.subr.bf16.mxu0 %v214
  %433 = vmatpush1.bf16.msra.mxu0 %v213
  %434 = vmatprep.subr.bf16.mxu0 %v216
  %435 = vmatpush1.bf16.msra.mxu0 %v215
  %436 = vmatprep.subr.bf16.mxu0 %v218
  %437 = vmatpush1.bf16.msra.mxu0 %v217
  %438 = vmatprep.subr.bf16.mxu0 %v220
  %439 = vmatpush1.bf16.msra.mxu0 %v219
  %440 = vmatprep.subr.bf16.mxu0 0
  %441 = vmatpush1.bf16.msra.mxu0 0
  %442 = vmatprep.subr.bf16.mxu0 0
  %443 = vmatpush1.bf16.msra.mxu0 0
  %444 = vmatprep.subr.bf16.mxu0 0
  %445 = vmatpush1.bf16.msra.mxu0 0
  %446 = vmatprep.subr.bf16.mxu0 0
  %447 = vmatpush1.bf16.msra.mxu0 0
  %448 = vmatprep.subr.bf16.mxu0 0
  %449 = vmatpush1.bf16.msra.mxu0 0
  %450 = vmatprep.subr.bf16.mxu0 0
  %451 = vmatpush1.bf16.msra.mxu0 0
  %452 = vmatprep.subr.bf16.mxu0 0
  %453 = vmatpush1.bf16.msra.mxu0 0
  %454 = vmatprep.subr.bf16.mxu0 0
  %455 = vmatpush1.bf16.msra.mxu0 0
  %456 = vmatprep.subr.bf16.mxu0 0
  %457 = vmatpush1.bf16.msra.mxu0 0
  %458 = vmatprep.subr.bf16.mxu0 0
  %459 = vmatpush1.bf16.msra.mxu0 0
  %460 = vmatprep.subr.bf16.mxu0 0
  %461 = vmatpush1.bf16.msra.mxu0 0
  %462 = vmatprep.subr.bf16.mxu0 0
  %463 = vmatpush1.bf16.msra.mxu0 0
  %464 = vmatprep.mubr.bf16.mxu0 0
  %465 = vmatmul.mubr.bf16.gmra.mrb[0].mxu0 %v430
  %v466 = vpop.f32.mrb[0].mxu0
  %v467 = vadd.f32 %v129, %v466
  %v468 = vpop.f32.mrb[0].mxu0
  %v469 = vadd.f32 %v131, %v468
  %v470 = vpop.f32.mrb[0].mxu0
  %v471 = vpop.f32.mrb[0].mxu0
  %472 = vdwg.mxu0
  %v473 = vmul.f32 %v467, %v156
  %v474 = vmul.f32 %v469, %v157
  %v475 = vtanh.pop %v473
  %v476 = vtanh.pop %v474
  %v477 = vmul.f32 %v475, %v156
  %v478 = vmul.f32 %v476, %v157
  %v479 = vadd.f32 %v477, %v158
  %v480 = vadd.f32 %v478, %v159
  %v481 = vmul.f32 %v479, %v422
  %v482 = vmul.f32 %v479, %v480
  %484 = vrot.lane.b32.xlu0 %v482, 64
  %v485 = vpop.permute.xlu0 %484
  %v487 = vadd.f32 %v481, %v485
  %v488 = vtanh.pop %v487
  %v489 = vmul.f32 %v480, %v488
  %v490 = vpack.c.bf16 %v489, %v489
  %492 = vrot.lane.b32.xlu0 %v490, 64
  %v493 = vpop.permute.xlu0 %492
  %v495 = vsel %vm229, %v493, 0
  %497 = vmatprep.subr.bf16.mxu0 %v214
  %498 = vmatpush1.bf16.msra.mxu0 %v213
  %499 = vmatprep.subr.bf16.mxu0 %v216
  %500 = vmatpush1.bf16.msra.mxu0 %v215
  %501 = vmatprep.subr.bf16.mxu0 %v218
  %502 = vmatpush1.bf16.msra.mxu0 %v217
  %503 = vmatprep.subr.bf16.mxu0 %v220
  %504 = vmatpush1.bf16.msra.mxu0 %v219
  %505 = vmatprep.subr.bf16.mxu0 0
  %506 = vmatpush1.bf16.msra.mxu0 0
  %507 = vmatprep.subr.bf16.mxu0 0
  %508 = vmatpush1.bf16.msra.mxu0 0
  %509 = vmatprep.subr.bf16.mxu0 0
  %510 = vmatpush1.bf16.msra.mxu0 0
  %511 = vmatprep.subr.bf16.mxu0 0
  %512 = vmatpush1.bf16.msra.mxu0 0
  %513 = vmatprep.subr.bf16.mxu0 0
  %514 = vmatpush1.bf16.msra.mxu0 0
  %515 = vmatprep.subr.bf16.mxu0 0
  %516 = vmatpush1.bf16.msra.mxu0 0
  %517 = vmatprep.subr.bf16.mxu0 0
  %518 = vmatpush1.bf16.msra.mxu0 0
  %519 = vmatprep.subr.bf16.mxu0 0
  %520 = vmatpush1.bf16.msra.mxu0 0
  %521 = vmatprep.subr.bf16.mxu0 0
  %522 = vmatpush1.bf16.msra.mxu0 0
  %523 = vmatprep.subr.bf16.mxu0 0
  %524 = vmatpush1.bf16.msra.mxu0 0
  %525 = vmatprep.subr.bf16.mxu0 0
  %526 = vmatpush1.bf16.msra.mxu0 0
  %527 = vmatprep.subr.bf16.mxu0 0
  %528 = vmatpush1.bf16.msra.mxu0 0
  %529 = vmatprep.mubr.bf16.mxu0 0
  %530 = vmatmul.mubr.bf16.gmra.mrb[0].mxu0 %v495
  %v531 = vpop.f32.mrb[0].mxu0
  %v532 = vadd.f32 %v133, %v531
  %v533 = vpop.f32.mrb[0].mxu0
  %v534 = vadd.f32 %v135, %v533
  %v535 = vpop.f32.mrb[0].mxu0
  %v536 = vpop.f32.mrb[0].mxu0
  %537 = vdwg.mxu0
  %v538 = vmul.f32 %v532, %v156
  %v539 = vmul.f32 %v534, %v157
  %v540 = vtanh.pop %v538
  %v541 = vtanh.pop %v539
  %v542 = vmul.f32 %v540, %v156
  %v543 = vmul.f32 %v541, %v157
  %v544 = vadd.f32 %v542, %v158
  %v545 = vadd.f32 %v543, %v159
  %v546 = vmul.f32 %v544, %v487
  %v547 = vmul.f32 %v544, %v545
  %549 = vrot.lane.b32.xlu0 %v547, 64
  %v550 = vpop.permute.xlu0 %549
  %v552 = vadd.f32 %v546, %v550
  %v553 = vtanh.pop %v552
  %v554 = vmul.f32 %v545, %v553
  %v555 = vpack.c.bf16 %v554, %v554
  %557 = vrot.lane.b32.xlu0 %v555, 64
  %v558 = vpop.permute.xlu0 %557
  %v560 = vsel %vm229, %v558, 0
  %562 = vmatprep.subr.bf16.mxu0 %v214
  %563 = vmatpush1.bf16.msra.mxu0 %v213
  %564 = vmatprep.subr.bf16.mxu0 %v216
  %565 = vmatpush1.bf16.msra.mxu0 %v215
  %566 = vmatprep.subr.bf16.mxu0 %v218
  %567 = vmatpush1.bf16.msra.mxu0 %v217
  %568 = vmatprep.subr.bf16.mxu0 %v220
  %569 = vmatpush1.bf16.msra.mxu0 %v219
  %570 = vmatprep.subr.bf16.mxu0 0
  %571 = vmatpush1.bf16.msra.mxu0 0
  %572 = vmatprep.subr.bf16.mxu0 0
  %573 = vmatpush1.bf16.msra.mxu0 0
  %574 = vmatprep.subr.bf16.mxu0 0
  %575 = vmatpush1.bf16.msra.mxu0 0
  %576 = vmatprep.subr.bf16.mxu0 0
  %577 = vmatpush1.bf16.msra.mxu0 0
  %578 = vmatprep.subr.bf16.mxu0 0
  %579 = vmatpush1.bf16.msra.mxu0 0
  %580 = vmatprep.subr.bf16.mxu0 0
  %581 = vmatpush1.bf16.msra.mxu0 0
  %582 = vmatprep.subr.bf16.mxu0 0
  %583 = vmatpush1.bf16.msra.mxu0 0
  %584 = vmatprep.subr.bf16.mxu0 0
  %585 = vmatpush1.bf16.msra.mxu0 0
  %586 = vmatprep.subr.bf16.mxu0 0
  %587 = vmatpush1.bf16.msra.mxu0 0
  %588 = vmatprep.subr.bf16.mxu0 0
  %589 = vmatpush1.bf16.msra.mxu0 0
  %590 = vmatprep.subr.bf16.mxu0 0
  %591 = vmatpush1.bf16.msra.mxu0 0
  %592 = vmatprep.subr.bf16.mxu0 0
  %593 = vmatpush1.bf16.msra.mxu0 0
  %594 = vmatprep.mubr.bf16.mxu0 0
  %595 = vmatmul.mubr.bf16.gmra.mrb[0].mxu0 %v560
  %v596 = vpop.f32.mrb[0].mxu0
  %v597 = vadd.f32 %v139, %v596
  %v598 = vpop.f32.mrb[0].mxu0
  %v599 = vadd.f32 %v141, %v598
  %v600 = vpop.f32.mrb[0].mxu0
  %v601 = vpop.f32.mrb[0].mxu0
  %602 = vdwg.mxu0
  %v603 = vmul.f32 %v597, %v156
  %v604 = vmul.f32 %v599, %v157
  %v605 = vtanh.pop %v603
  %v606 = vtanh.pop %v604
  %v607 = vmul.f32 %v605, %v156
  %v608 = vmul.f32 %v606, %v157
  %v609 = vadd.f32 %v607, %v158
  %v610 = vadd.f32 %v608, %v159
  %v611 = vmul.f32 %v609, %v552
  %v612 = vmul.f32 %v609, %v610
  %614 = vrot.lane.b32.xlu0 %v612, 64
  %v615 = vpop.permute.xlu0 %614
  %v617 = vadd.f32 %v611, %v615
  %v618 = vtanh.pop %v617
  %v619 = vmul.f32 %v610, %v618
  %v620 = vpack.c.bf16 %v619, %v619
  %622 = vrot.lane.b32.xlu0 %v620, 64
  %v623 = vpop.permute.xlu0 %622
  %v625 = vsel %vm229, %v623, 0
  %627 = vmatprep.subr.bf16.mxu0 %v214
  %628 = vmatpush1.bf16.msra.mxu0 %v213
  %629 = vmatprep.subr.bf16.mxu0 %v216
  %630 = vmatpush1.bf16.msra.mxu0 %v215
  %631 = vmatprep.subr.bf16.mxu0 %v218
  %632 = vmatpush1.bf16.msra.mxu0 %v217
  %633 = vmatprep.subr.bf16.mxu0 %v220
  %634 = vmatpush1.bf16.msra.mxu0 %v219
  %635 = vmatprep.subr.bf16.mxu0 0
  %636 = vmatpush1.bf16.msra.mxu0 0
  %637 = vmatprep.subr.bf16.mxu0 0
  %638 = vmatpush1.bf16.msra.mxu0 0
  %639 = vmatprep.subr.bf16.mxu0 0
  %640 = vmatpush1.bf16.msra.mxu0 0
  %641 = vmatprep.subr.bf16.mxu0 0
  %642 = vmatpush1.bf16.msra.mxu0 0
  %643 = vmatprep.subr.bf16.mxu0 0
  %644 = vmatpush1.bf16.msra.mxu0 0
  %645 = vmatprep.subr.bf16.mxu0 0
  %646 = vmatpush1.bf16.msra.mxu0 0
  %647 = vmatprep.subr.bf16.mxu0 0
  %648 = vmatpush1.bf16.msra.mxu0 0
  %649 = vmatprep.subr.bf16.mxu0 0
  %650 = vmatpush1.bf16.msra.mxu0 0
  %651 = vmatprep.subr.bf16.mxu0 0
  %652 = vmatpush1.bf16.msra.mxu0 0
  %653 = vmatprep.subr.bf16.mxu0 0
  %654 = vmatpush1.bf16.msra.mxu0 0
  %655 = vmatprep.subr.bf16.mxu0 0
  %656 = vmatpush1.bf16.msra.mxu0 0
  %657 = vmatprep.subr.bf16.mxu0 0
  %658 = vmatpush1.bf16.msra.mxu0 0
  %659 = vmatprep.mubr.bf16.mxu0 0
  %660 = vmatmul.mubr.bf16.gmra.mrb[0].mxu0 %v625
  %v661 = vpop.f32.mrb[0].mxu0
  %v662 = vadd.f32 %v143, %v661
  %v663 = vpop.f32.mrb[0].mxu0
  %v664 = vadd.f32 %v145, %v663
  %v665 = vpop.f32.mrb[0].mxu0
  %v666 = vpop.f32.mrb[0].mxu0
  %667 = vdwg.mxu0
  %v668 = vmul.f32 %v662, %v156
  %v669 = vmul.f32 %v664, %v157
  %v670 = vtanh.pop %v668
  %v671 = vtanh.pop %v669
  %v672 = vmul.f32 %v670, %v156
  %v673 = vmul.f32 %v671, %v157
  %v674 = vadd.f32 %v672, %v158
  %v675 = vadd.f32 %v673, %v159
  %v676 = vmul.f32 %v674, %v617
  %v677 = vmul.f32 %v674, %v675
  %679 = vrot.lane.b32.xlu0 %v677, 64
  %v680 = vpop.permute.xlu0 %679
  %v682 = vadd.f32 %v676, %v680
  %v683 = vtanh.pop %v682
  %v684 = vmul.f32 %v675, %v683
  %v685 = vpack.c.bf16 %v684, %v684
  %687 = vrot.lane.b32.xlu0 %v685, 64
  %v688 = vpop.permute.xlu0 %687
  %v690 = vsel %vm229, %v688, 0
  %692 = vmatprep.subr.bf16.mxu0 %v214
  %693 = vmatpush1.bf16.msra.mxu0 %v213
  %694 = vmatprep.subr.bf16.mxu0 %v216
  %695 = vmatpush1.bf16.msra.mxu0 %v215
  %696 = vmatprep.subr.bf16.mxu0 %v218
  %697 = vmatpush1.bf16.msra.mxu0 %v217
  %698 = vmatprep.subr.bf16.mxu0 %v220
  %699 = vmatpush1.bf16.msra.mxu0 %v219
  %700 = vmatprep.subr.bf16.mxu0 0
  %701 = vmatpush1.bf16.msra.mxu0 0
  %702 = vmatprep.subr.bf16.mxu0 0
  %703 = vmatpush1.bf16.msra.mxu0 0
  %704 = vmatprep.subr.bf16.mxu0 0
  %705 = vmatpush1.bf16.msra.mxu0 0
  %706 = vmatprep.subr.bf16.mxu0 0
  %707 = vmatpush1.bf16.msra.mxu0 0
  %708 = vmatprep.subr.bf16.mxu0 0
  %709 = vmatpush1.bf16.msra.mxu0 0
  %710 = vmatprep.subr.bf16.mxu0 0
  %711 = vmatpush1.bf16.msra.mxu0 0
  %712 = vmatprep.subr.bf16.mxu0 0
  %713 = vmatpush1.bf16.msra.mxu0 0
  %714 = vmatprep.subr.bf16.mxu0 0
  %715 = vmatpush1.bf16.msra.mxu0 0
  %716 = vmatprep.subr.bf16.mxu0 0
  %717 = vmatpush1.bf16.msra.mxu0 0
  %718 = vmatprep.subr.bf16.mxu0 0
  %719 = vmatpush1.bf16.msra.mxu0 0
  %720 = vmatprep.subr.bf16.mxu0 0
  %721 = vmatpush1.bf16.msra.mxu0 0
  %722 = vmatprep.subr.bf16.mxu0 0
  %723 = vmatpush1.bf16.msra.mxu0 0
  %724 = vmatprep.mubr.bf16.mxu0 0
  %725 = vmatmul.mubr.bf16.gmra.mrb[0].mxu0 %v690
  %v726 = vpop.f32.mrb[0].mxu0
  %v727 = vadd.f32 %v44, %v726
  %v728 = vpop.f32.mrb[0].mxu0
  %v729 = vadd.f32 %v48, %v728
  %v730 = vpop.f32.mrb[0].mxu0
  %v731 = vpop.f32.mrb[0].mxu0
  %732 = vdwg.mxu0
  %v733 = vmul.f32 %v727, %v156
  %v734 = vmul.f32 %v729, %v157
  %v735 = vtanh.pop %v733
  %v736 = vtanh.pop %v734
  %v737 = vmul.f32 %v735, %v156
  %v738 = vmul.f32 %v736, %v157
  %v739 = vadd.f32 %v737, %v158
  %v740 = vadd.f32 %v738, %v159
  %v741 = vmul.f32 %v739, %v682
  %v742 = vmul.f32 %v739, %v740
  %744 = vrot.lane.b32.xlu0 %v742, 64
  %v745 = vpop.permute.xlu0 %744
  %v747 = vadd.f32 %v741, %v745
  %v748 = vtanh.pop %v747
  %v749 = vmul.f32 %v740, %v748
  %v750 = vlaneseq
  %v751 = vshrl.u32 %v750, 7
  %v752 = vsub.s32 0, %v751
  %v753 = vrot.slane %v26, %v752
  %755 = vrot.lane.b32.xlu0 %v753, 96
  %v756 = vpop.permute.xlu0 %755
  %v758 = vmul.f32 %v749, %v756
  %760 = vrot.lane.b32.xlu0 %v758, 32
  %v761 = vpop.permute.xlu0 %760
  %vm763 = vcmask 261120
  %v764 = vsel %vm763, %v761, 0.0
  %765 = vadd.xlane.f32.xlu0 %v764
  %v766 = vpop.xlane.xlu0 %765
  %v767 = vlaneseq
  %v768 = vshrl.u32 %v767, 7
  %v769 = vsub.s32 0, %v768
  %v770 = vrot.slane %v27, %v769
  %v771 = vadd.f32 %v766, %v770
  %v772 = vxor.u32 %v771, 2147483648
  %v773 = vmul.f32 %v772, 1.442695
  %v774 = vpow.pop %v773
  %v775 = vadd.f32 %v774, 1.0
  %v776 = vrcp.pop %v775
  %v777 = vmul.f32 1.0, %v776
  %vm778 = vcmask 7168
  %779 = vst.msk [vmem:[%s3] sm:$0xff] %vm778, %v777
  // Predicated region
  $region14: #{teacher_model_forward.1} parent=0 // pred_check
    _
  $region15: #{teacher_model_forward.1} parent=0 // pred_check_branch
    %781 = sbr.rel (0) target = $region17
  $region16: #{teacher_model_forward.1} parent=0 // pred_region
    _
  $region17: #{teacher_model_forward.1} parent=0 // pred_fallthru
    _
  // Predicated region
  $region18: #{teacher_model_forward.1} parent=0 // pred_check
    _
  $region19: #{teacher_model_forward.1} parent=0 // pred_check_branch
    %783 = sbr.rel (0) target = $region21
  $region20: #{teacher_model_forward.1} parent=0 // pred_region
    _
  $region21: #{teacher_model_forward.1} parent=0 // pred_fallthru
    _

</llo_original>
